<compile_context>
chip_gen: v7x
topology: tpu7x:2x2x1
jax: 0.10.0
libtpu: 0.0.40
codegen_flags: <defaults>
</compile_context>

<pallas_src>
import functools

import jax
import jax.numpy as jnp
from jax import lax
from jax.experimental import pallas as pl
from jax.experimental.pallas import tpu as pltpu


_INV_SQRT2 = 0.7071067811865476
_SQRT_2_OVER_PI = 0.7978845608028654


def _round_up(x, m):
    return (x + m - 1) // m * m


def _gelu(x, act_dtype):
    """GELU.  Exact erf in f32 (matches torch.nn.GELU()).  When the activation
    chain is requested in bf16 (v6e/v7x), use the tanh approximation so the
    transcendental lands on the EUP slot instead of a long f32 VALU polynomial."""
    if act_dtype == jnp.float32:
        x = x.astype(jnp.float32)
        return 0.5 * x * (1.0 + lax.erf(x * _INV_SQRT2))
    x = x.astype(act_dtype)
    c = jnp.asarray(_SQRT_2_OVER_PI, act_dtype)
    k = jnp.asarray(0.044715, act_dtype)
    half = jnp.asarray(0.5, act_dtype)
    one = jnp.asarray(1.0, act_dtype)
    return half * x * (one + jnp.tanh(c * (x + k * x * x * x)))


def step_operator_kernel(
    x_ref,                                   # [tb, hist_dim+1]  ( hist | tau )
    te_w1_ref, te_b1_ref, te_w2_ref, te_b2_ref,
    p_w1h_ref, p_w1t_ref, p_b1_ref,
    p_w2_ref, p_b2_ref,
    p_w3_ref, p_b3_ref,
    out_ref,                                 # [tb, out_dim]
    *, hist_dim, act_dtype,
):
    f32 = jnp.float32
    mm = p_w2_ref.dtype                      # MXU operand dtype (f32 or bf16)

    x = x_ref[...]                           # slab already stored in mm dtype
    hist = x[:, :hist_dim]                   # [tb, hist_dim]   (lane-aligned at 0)
    tau = x[:, hist_dim:hist_dim + 1].astype(f32)   # [tb, 1]

    # --- hist-side layer-1 matmul first (independent of tau): the MXU push
    #     overlaps the VALU/EUP-bound tau-embedding chain below.
    z1_hist = jnp.dot(hist, p_w1h_ref[...], preferred_element_type=f32)  # [tb, hidden]

    # --- tau embedding MLP.  Linear(1, tau_dim) is K=1: do it on the VPU as a
    #     broadcast outer product instead of pushing a K=1 matmul through the MXU.
    h = _gelu(tau * te_w1_ref[...] + te_b1_ref[...], act_dtype)          # [tb, tau_dim]
    tau_e = _gelu(jnp.dot(h.astype(mm), te_w2_ref[...],
                          preferred_element_type=f32) + te_b2_ref[...], act_dtype)

    # --- predictor: concat([hist, tau_e]) @ W1 == hist@W1h + tau_e@W1t
    z1 = _gelu(z1_hist
               + jnp.dot(tau_e.astype(mm), p_w1t_ref[...], preferred_element_type=f32)
               + p_b1_ref[...], act_dtype)                                # [tb, hidden]
    z2 = _gelu(jnp.dot(z1.astype(mm), p_w2_ref[...],
                       preferred_element_type=f32) + p_b2_ref[...], act_dtype)

    out = jnp.dot(z2.astype(mm), p_w3_ref[...],
                  preferred_element_type=f32) + p_b3_ref[...]             # [tb, out_dim]
    out_ref[...] = out.astype(out_ref.dtype)


def step_operator_forward(hist_vec, tau, params, *, out_len, out_channels,
                          matmul_dtype=jnp.bfloat16,
                          activation_dtype=jnp.float32,
                          max_tile_b=512,
                          core_parallel=False):
    """hist_vec: [B, hist_dim], tau: [B] or [B, 1] -> [B, out_len, out_channels]."""
    f32 = jnp.float32
    B, hist_dim = hist_vec.shape
    out_dim = out_len * out_channels
    mm = jnp.dtype(matmul_dtype)
    act_dtype = jnp.dtype(activation_dtype)

    # --- merge tau into the hist slab: one streamed input, one DMA per grid step
    slab = jnp.concatenate(
        [hist_vec.astype(f32), tau.reshape(B, 1).astype(f32)], axis=-1)   # [B, hist_dim+1]

    # --- batch tiling: biggest tile that makes sense, multiple of 32 (safe for
    #     bf16 sublane packing); >= 2 grid steps when B is large enough so both
    #     v7x TensorCores get work.
    max_tile_b = max(32, _round_up(max_tile_b, 32))
    if B < 64:
        tile_b = min(_round_up(B, 32), max_tile_b)
    else:
        tile_b = min(_round_up((B + 1) // 2, 32), max_tile_b)
    B_pad = _round_up(B, tile_b)
    if B_pad != B:
        slab = jnp.pad(slab, ((0, B_pad - B), (0, 0)))
    slab = slab.astype(mm)                    # bf16 slab halves streamed-input BW

    # --- weights: MXU operands in matmul_dtype; biases & the K=1 VPU weight in f32
    te_w1 = params["te_w1"].astype(f32)       # used on the VPU (broadcast) -> f32
    te_b1 = params["te_b1"].astype(f32)
    te_w2 = params["te_w2"].astype(mm)
    te_b2 = params["te_b2"].astype(f32)
    p_w1h = params["p_w1h"].astype(mm)
    p_w1t = params["p_w1t"].astype(mm)
    p_b1 = params["p_b1"].astype(f32)
    p_w2 = params["p_w2"].astype(mm)
    p_b2 = params["p_b2"].astype(f32)
    p_w3 = params["p_w3"].astype(mm)          # NOT padded: output keeps true width
    p_b3 = params["p_b3"].astype(f32)

    weights = (te_w1, te_b1, te_w2, te_b2, p_w1h, p_w1t, p_b1, p_w2, p_b2, p_w3, p_b3)

    def stream(shape):                        # per-grid-step streamed block
        return pl.BlockSpec(shape, lambda i: (i, 0))

    def resident(arr):                        # same block every step -> stays in VMEM
        return pl.BlockSpec(arr.shape, lambda i: (0, 0))

    in_specs = [stream((tile_b, hist_dim + 1))] + [resident(w) for w in weights]
    # Unpadded, full-last-dim output block (legal: last dim == full array dim).
    # If the output writeback DMA ever shows up as exposed at very large tiles,
    # add pipeline_mode=pl.Buffered(3) here.
    out_specs = stream((tile_b, out_dim))
    grid = (B_pad // tile_b,)

    hidden = p_w2.shape[0]
    tau_dim = te_w2.shape[0]

    # advisory scheduling hint for XLA around the custom call
    flops = 2 * B_pad * (tau_dim + tau_dim * tau_dim
                         + (hist_dim + tau_dim) * hidden
                         + hidden * hidden + hidden * out_dim)
    transcendentals = B_pad * 2 * (tau_dim + hidden)
    bytes_weights = sum(int(w.size) * w.dtype.itemsize for w in weights)
    bytes_accessed = (int(slab.size) * slab.dtype.itemsize
                      + B_pad * out_dim * 4 + bytes_weights)

    # Only what the kernel needs (intermediates + double-buffered tiles + weights),
    # leaving scoped-VMEM headroom for surrounding XLA fusions.
    vmem_limit = int(min(64 << 20, max(8 << 20, 24 * tile_b * hidden * 4)))
    dim_sem = (pltpu.CORE_PARALLEL,) if core_parallel else ("parallel",)

    kernel = functools.partial(step_operator_kernel,
                               hist_dim=hist_dim, act_dtype=act_dtype)

    out_flat = pl.pallas_call(
        kernel,
        out_shape=jax.ShapeDtypeStruct((B_pad, out_dim), f32),
        grid=grid,
        in_specs=in_specs,
        out_specs=out_specs,
        compiler_params=pltpu.CompilerParams(
            dimension_semantics=dim_sem,
            vmem_limit_bytes=vmem_limit,
        ),
        cost_estimate=pl.CostEstimate(flops=int(flops),
                                      transcendentals=int(transcendentals),
                                      bytes_accessed=int(bytes_accessed)),
    )(slab, *weights)

    if B_pad != B:
        out_flat = out_flat[:B]
    return out_flat.reshape(B, out_len, out_channels)


def init_params(key, hist_dim, tau_dim, hidden, out_len, out_channels, dtype=jnp.float32):
    """Deterministic init, PyTorch-style uniform(+-1/sqrt(fan_in)). Weights stored [in, out]."""
    def linear(key, fan_in, fan_out):
        kw, kb = jax.random.split(key)
        bound = 1.0 / (fan_in ** 0.5)
        w = jax.random.uniform(kw, (fan_in, fan_out), dtype, -bound, bound)
        b = jax.random.uniform(kb, (1, fan_out), dtype, -bound, bound)
        return w, b

    keys = jax.random.split(key, 5)
    te_w1, te_b1 = linear(keys[0], 1, tau_dim)
    te_w2, te_b2 = linear(keys[1], tau_dim, tau_dim)
    p_w1, p_b1 = linear(keys[2], hist_dim + tau_dim, hidden)
    p_w2, p_b2 = linear(keys[3], hidden, hidden)
    p_w3, p_b3 = linear(keys[4], hidden, out_len * out_channels)

    return {
        "te_w1": te_w1, "te_b1": te_b1, "te_w2": te_w2, "te_b2": te_b2,
        # split predictor layer-1 weight along its input axis: [hist_dim, H] and [tau_dim, H]
        "p_w1h": p_w1[:hist_dim], "p_w1t": p_w1[hist_dim:], "p_b1": p_b1,
        "p_w2": p_w2, "p_b2": p_b2,
        "p_w3": p_w3, "p_b3": p_b3,
    }


def _reference_forward(hist_vec, tau, params, *, out_len, out_channels):
    """Pure-JAX reference (mirrors the PyTorch module) for correctness checks."""
    B = hist_vec.shape[0]
    tau = tau.reshape(B, 1)
    g = lambda x: jax.nn.gelu(x, approximate=False)
    # Linear(1, tau_dim) on a [B,1] input is exactly a broadcast outer product.
    h = g(tau * params["te_w1"] + params["te_b1"])
    tau_e = g(h @ params["te_w2"] + params["te_b2"])
    z = jnp.concatenate([hist_vec, tau_e], axis=-1)
    w1 = jnp.concatenate([params["p_w1h"], params["p_w1t"]], axis=0)
    z = g(z @ w1 + params["p_b1"])
    z = g(z @ params["p_w2"] + params["p_b2"])
    out = z @ params["p_w3"] + params["p_b3"]
    return out.reshape(B, out_len, out_channels)


if __name__ == "__main__":
    hist_dim = 32
    tau_dim, hidden, out_len, out_channels = 16, 128, 32, 1

    key = jax.random.PRNGKey(0)
    k_params, k_hist, k_tau = jax.random.split(key, 3)
    params = init_params(k_params, hist_dim, tau_dim, hidden, out_len, out_channels)

    fwd = functools.partial(step_operator_forward, out_len=out_len,
                            out_channels=out_channels)
    ref_fwd = functools.partial(_reference_forward, out_len=out_len,
                                out_channels=out_channels)

    # --- small batch, f32 MXU operands: tight check vs the pure-JAX reference
    B = 8
    hist_vec = jax.random.normal(k_hist, (B, hist_dim), jnp.float32)
    tau = jax.random.uniform(k_tau, (B,), jnp.float32, 0.1, 1.0)
    out = jax.block_until_ready(fwd(hist_vec, tau, params, matmul_dtype=jnp.float32))
    ref = ref_fwd(hist_vec, tau, params)
    assert out.shape == (B, out_len, out_channels)
    assert jnp.allclose(out, ref, atol=5e-3, rtol=5e-3), \
        float(jnp.max(jnp.abs(out - ref)))

    # --- larger batch (exercises batch tiling, 2-step grid, padding) with the
    #     default bf16 MXU operands (f32 accumulation / biases / GELU)
    B2 = 200
    k_hist2, k_tau2 = jax.random.split(jax.random.PRNGKey(1))
    hist2 = jax.random.normal(k_hist2, (B2, hist_dim), jnp.float32)
    tau2 = jax.random.uniform(k_tau2, (B2,), jnp.float32, 0.1, 1.0)
    out2 = jax.block_until_ready(fwd(hist2, tau2, params, matmul_dtype=jnp.bfloat16))
    ref2 = ref_fwd(hist2, tau2, params)
    assert out2.shape == (B2, out_len, out_channels)
    assert jnp.allclose(out2, ref2, atol=5e-2, rtol=5e-2), \
        float(jnp.max(jnp.abs(out2 - ref2)))

    print("KERNEL_OK")
</pallas_src>

<mosaic_0001>
module attributes {stable_mosaic.version = 11 : i64} {
  func.func @step_operator_kernel(%arg0: i32, %arg1: memref<32x33xf32, #tpu.memory_space<vmem>>, %arg2: memref<1x16xf32, #tpu.memory_space<vmem>>, %arg3: memref<1x16xf32, #tpu.memory_space<vmem>>, %arg4: memref<16x16xf32, #tpu.memory_space<vmem>>, %arg5: memref<1x16xf32, #tpu.memory_space<vmem>>, %arg6: memref<32x128xf32, #tpu.memory_space<vmem>>, %arg7: memref<16x128xf32, #tpu.memory_space<vmem>>, %arg8: memref<1x128xf32, #tpu.memory_space<vmem>>, %arg9: memref<128x128xf32, #tpu.memory_space<vmem>>, %arg10: memref<1x128xf32, #tpu.memory_space<vmem>>, %arg11: memref<128x32xf32, #tpu.memory_space<vmem>>, %arg12: memref<1x32xf32, #tpu.memory_space<vmem>>, %arg13: memref<32x32xf32, #tpu.memory_space<vmem>>) attributes {dimension_semantics = [#tpu.dimension_semantics<parallel>], iteration_bounds = array<i64: 1>, scalar_prefetch = 0 : i64, scratch_operands = 0 : i64, tpu.core_type = #tpu.core_type<tc>, window_params = [{transform_indices = @transform_0, window_bounds = array<i64: 32, 33>}, {pipeline_mode = #tpu.pipeline_mode<synchronous>, transform_indices = @transform_1, window_bounds = array<i64: 1, 16>}, {pipeline_mode = #tpu.pipeline_mode<synchronous>, transform_indices = @transform_2, window_bounds = array<i64: 1, 16>}, {pipeline_mode = #tpu.pipeline_mode<synchronous>, transform_indices = @transform_3, window_bounds = array<i64: 16, 16>}, {pipeline_mode = #tpu.pipeline_mode<synchronous>, transform_indices = @transform_4, window_bounds = array<i64: 1, 16>}, {pipeline_mode = #tpu.pipeline_mode<synchronous>, transform_indices = @transform_5, window_bounds = array<i64: 32, 128>}, {pipeline_mode = #tpu.pipeline_mode<synchronous>, transform_indices = @transform_6, window_bounds = array<i64: 16, 128>}, {pipeline_mode = #tpu.pipeline_mode<synchronous>, transform_indices = @transform_7, window_bounds = array<i64: 1, 128>}, {pipeline_mode = #tpu.pipeline_mode<synchronous>, transform_indices = @transform_8, window_bounds = array<i64: 128, 128>}, {pipeline_mode = #tpu.pipeline_mode<synchronous>, transform_indices = @transform_9, window_bounds = array<i64: 1, 128>}, {pipeline_mode = #tpu.pipeline_mode<synchronous>, transform_indices = @transform_10, window_bounds = array<i64: 128, 32>}, {pipeline_mode = #tpu.pipeline_mode<synchronous>, transform_indices = @transform_11, window_bounds = array<i64: 1, 32>}, {transform_indices = @transform_12, window_bounds = array<i64: 32, 32>}]} {
    %c0 = arith.constant 0 : index
    %c0_0 = arith.constant 0 : index
    %0 = vector.load %arg1[%c0, %c0_0] : memref<32x33xf32, #tpu.memory_space<vmem>>, vector<32x33xf32>
    %1 = vector.extract_strided_slice %0 {offsets = [0, 0], sizes = [32, 32], strides = [1, 1]} : vector<32x33xf32> to vector<32x32xf32>
    %2 = vector.extract_strided_slice %0 {offsets = [0, 32], sizes = [32, 1], strides = [1, 1]} : vector<32x33xf32> to vector<32x1xf32>
    %c0_1 = arith.constant 0 : index
    %c0_2 = arith.constant 0 : index
    %3 = vector.load %arg6[%c0_1, %c0_2] : memref<32x128xf32, #tpu.memory_space<vmem>>, vector<32x128xf32>
    %cst = arith.constant dense<0.000000e+00> : vector<32x128xf32>
    %4 = tpu.matmul %1, %3, %cst {dimension_numbers = #tpu.dot_dimension_numbers<[1], [0], [0], [1], [0, 0, 1, 1], [], []>} : vector<32x32xf32>, vector<32x128xf32>, vector<32x128xf32> -> vector<32x128xf32>
    %c0_3 = arith.constant 0 : index
    %c0_4 = arith.constant 0 : index
    %5 = vector.load %arg2[%c0_3, %c0_4] : memref<1x16xf32, #tpu.memory_space<vmem>>, vector<1x16xf32>
    %6 = vector.broadcast %2 : vector<32x1xf32> to vector<32x16xf32>
    %7 = vector.broadcast %5 : vector<1x16xf32> to vector<32x16xf32>
    %8 = arith.mulf %6, %7 : vector<32x16xf32>
    %c0_5 = arith.constant 0 : index
    %c0_6 = arith.constant 0 : index
    %9 = vector.load %arg3[%c0_5, %c0_6] : memref<1x16xf32, #tpu.memory_space<vmem>>, vector<1x16xf32>
    %10 = vector.broadcast %9 : vector<1x16xf32> to vector<32x16xf32>
    %11 = arith.addf %8, %10 : vector<32x16xf32>
    %cst_7 = arith.constant 5.000000e-01 : f32
    %12 = vector.broadcast %cst_7 : f32 to vector<32x16xf32>
    %13 = arith.mulf %12, %11 : vector<32x16xf32>
    %cst_8 = arith.constant 0.707106769 : f32
    %14 = vector.broadcast %cst_8 : f32 to vector<32x16xf32>
    %15 = arith.mulf %11, %14 : vector<32x16xf32>
    %16 = math.erf %15 : vector<32x16xf32>
    %cst_9 = arith.constant 1.000000e+00 : f32
    %17 = vector.broadcast %cst_9 : f32 to vector<32x16xf32>
    %18 = arith.addf %17, %16 : vector<32x16xf32>
    %19 = arith.mulf %13, %18 : vector<32x16xf32>
    %c0_10 = arith.constant 0 : index
    %c0_11 = arith.constant 0 : index
    %20 = vector.load %arg4[%c0_10, %c0_11] : memref<16x16xf32, #tpu.memory_space<vmem>>, vector<16x16xf32>
    %cst_12 = arith.constant dense<0.000000e+00> : vector<32x16xf32>
    %21 = tpu.matmul %19, %20, %cst_12 {dimension_numbers = #tpu.dot_dimension_numbers<[1], [0], [0], [1], [0, 0, 1, 1], [], []>} : vector<32x16xf32>, vector<16x16xf32>, vector<32x16xf32> -> vector<32x16xf32>
    %c0_13 = arith.constant 0 : index
    %c0_14 = arith.constant 0 : index
    %22 = vector.load %arg5[%c0_13, %c0_14] : memref<1x16xf32, #tpu.memory_space<vmem>>, vector<1x16xf32>
    %23 = vector.broadcast %22 : vector<1x16xf32> to vector<32x16xf32>
    %24 = arith.addf %21, %23 : vector<32x16xf32>
    %cst_15 = arith.constant 5.000000e-01 : f32
    %25 = vector.broadcast %cst_15 : f32 to vector<32x16xf32>
    %26 = arith.mulf %25, %24 : vector<32x16xf32>
    %cst_16 = arith.constant 0.707106769 : f32
    %27 = vector.broadcast %cst_16 : f32 to vector<32x16xf32>
    %28 = arith.mulf %24, %27 : vector<32x16xf32>
    %29 = math.erf %28 : vector<32x16xf32>
    %cst_17 = arith.constant 1.000000e+00 : f32
    %30 = vector.broadcast %cst_17 : f32 to vector<32x16xf32>
    %31 = arith.addf %30, %29 : vector<32x16xf32>
    %32 = arith.mulf %26, %31 : vector<32x16xf32>
    %c0_18 = arith.constant 0 : index
    %c0_19 = arith.constant 0 : index
    %33 = vector.load %arg7[%c0_18, %c0_19] : memref<16x128xf32, #tpu.memory_space<vmem>>, vector<16x128xf32>
    %cst_20 = arith.constant dense<0.000000e+00> : vector<32x128xf32>
    %34 = tpu.matmul %32, %33, %cst_20 {dimension_numbers = #tpu.dot_dimension_numbers<[1], [0], [0], [1], [0, 0, 1, 1], [], []>} : vector<32x16xf32>, vector<16x128xf32>, vector<32x128xf32> -> vector<32x128xf32>
    %35 = arith.addf %4, %34 : vector<32x128xf32>
    %c0_21 = arith.constant 0 : index
    %c0_22 = arith.constant 0 : index
    %36 = vector.load %arg8[%c0_21, %c0_22] : memref<1x128xf32, #tpu.memory_space<vmem>>, vector<1x128xf32>
    %37 = vector.broadcast %36 : vector<1x128xf32> to vector<32x128xf32>
    %38 = arith.addf %35, %37 : vector<32x128xf32>
    %cst_23 = arith.constant 5.000000e-01 : f32
    %39 = vector.broadcast %cst_23 : f32 to vector<32x128xf32>
    %40 = arith.mulf %39, %38 : vector<32x128xf32>
    %cst_24 = arith.constant 0.707106769 : f32
    %41 = vector.broadcast %cst_24 : f32 to vector<32x128xf32>
    %42 = arith.mulf %38, %41 : vector<32x128xf32>
    %43 = math.erf %42 : vector<32x128xf32>
    %cst_25 = arith.constant 1.000000e+00 : f32
    %44 = vector.broadcast %cst_25 : f32 to vector<32x128xf32>
    %45 = arith.addf %44, %43 : vector<32x128xf32>
    %46 = arith.mulf %40, %45 : vector<32x128xf32>
    %c0_26 = arith.constant 0 : index
    %c0_27 = arith.constant 0 : index
    %47 = vector.load %arg9[%c0_26, %c0_27] : memref<128x128xf32, #tpu.memory_space<vmem>>, vector<128x128xf32>
    %cst_28 = arith.constant dense<0.000000e+00> : vector<32x128xf32>
    %48 = tpu.matmul %46, %47, %cst_28 {dimension_numbers = #tpu.dot_dimension_numbers<[1], [0], [0], [1], [0, 0, 1, 1], [], []>} : vector<32x128xf32>, vector<128x128xf32>, vector<32x128xf32> -> vector<32x128xf32>
    %c0_29 = arith.constant 0 : index
    %c0_30 = arith.constant 0 : index
    %49 = vector.load %arg10[%c0_29, %c0_30] : memref<1x128xf32, #tpu.memory_space<vmem>>, vector<1x128xf32>
    %50 = vector.broadcast %49 : vector<1x128xf32> to vector<32x128xf32>
    %51 = arith.addf %48, %50 : vector<32x128xf32>
    %cst_31 = arith.constant 5.000000e-01 : f32
    %52 = vector.broadcast %cst_31 : f32 to vector<32x128xf32>
    %53 = arith.mulf %52, %51 : vector<32x128xf32>
    %cst_32 = arith.constant 0.707106769 : f32
    %54 = vector.broadcast %cst_32 : f32 to vector<32x128xf32>
    %55 = arith.mulf %51, %54 : vector<32x128xf32>
    %56 = math.erf %55 : vector<32x128xf32>
    %cst_33 = arith.constant 1.000000e+00 : f32
    %57 = vector.broadcast %cst_33 : f32 to vector<32x128xf32>
    %58 = arith.addf %57, %56 : vector<32x128xf32>
    %59 = arith.mulf %53, %58 : vector<32x128xf32>
    %c0_34 = arith.constant 0 : index
    %c0_35 = arith.constant 0 : index
    %60 = vector.load %arg11[%c0_34, %c0_35] : memref<128x32xf32, #tpu.memory_space<vmem>>, vector<128x32xf32>
    %cst_36 = arith.constant dense<0.000000e+00> : vector<32x32xf32>
    %61 = tpu.matmul %59, %60, %cst_36 {dimension_numbers = #tpu.dot_dimension_numbers<[1], [0], [0], [1], [0, 0, 1, 1], [], []>} : vector<32x128xf32>, vector<128x32xf32>, vector<32x32xf32> -> vector<32x32xf32>
    %c0_37 = arith.constant 0 : index
    %c0_38 = arith.constant 0 : index
    %62 = vector.load %arg12[%c0_37, %c0_38] : memref<1x32xf32, #tpu.memory_space<vmem>>, vector<1x32xf32>
    %63 = vector.broadcast %62 : vector<1x32xf32> to vector<32x32xf32>
    %64 = arith.addf %61, %63 : vector<32x32xf32>
    %c0_39 = arith.constant 0 : index
    %c0_40 = arith.constant 0 : index
    %65 = vector.load %arg13[%c0_39, %c0_40] : memref<32x32xf32, #tpu.memory_space<vmem>>, vector<32x32xf32>
    tpu.vector_store %arg13[%c0_39, %c0_40], %64 {strides = array<i32>} : memref<32x32xf32, #tpu.memory_space<vmem>>, vector<32x32xf32>,
    return
  }
  func.func @transform_0(%arg0: i32) -> (i32, i32) {
    %c0_i32 = arith.constant 0 : i32
    %c0_i32_0 = arith.constant 0 : i32
    return %arg0, %c0_i32 : i32, i32
  }
  func.func @transform_1(%arg0: i32) -> (i32, i32) {
    %c0_i32 = arith.constant 0 : i32
    %c0_i32_0 = arith.constant 0 : i32
    %c0_i32_1 = arith.constant 0 : i32
    return %c0_i32, %c0_i32_0 : i32, i32
  }
  func.func @transform_2(%arg0: i32) -> (i32, i32) {
    %c0_i32 = arith.constant 0 : i32
    %c0_i32_0 = arith.constant 0 : i32
    %c0_i32_1 = arith.constant 0 : i32
    return %c0_i32, %c0_i32_0 : i32, i32
  }
  func.func @transform_3(%arg0: i32) -> (i32, i32) {
    %c0_i32 = arith.constant 0 : i32
    %c0_i32_0 = arith.constant 0 : i32
    %c0_i32_1 = arith.constant 0 : i32
    return %c0_i32, %c0_i32_0 : i32, i32
  }
  func.func @transform_4(%arg0: i32) -> (i32, i32) {
    %c0_i32 = arith.constant 0 : i32
    %c0_i32_0 = arith.constant 0 : i32
    %c0_i32_1 = arith.constant 0 : i32
    return %c0_i32, %c0_i32_0 : i32, i32
  }
  func.func @transform_5(%arg0: i32) -> (i32, i32) {
    %c0_i32 = arith.constant 0 : i32
    %c0_i32_0 = arith.constant 0 : i32
    %c0_i32_1 = arith.constant 0 : i32
    return %c0_i32, %c0_i32_0 : i32, i32
  }
  func.func @transform_6(%arg0: i32) -> (i32, i32) {
    %c0_i32 = arith.constant 0 : i32
    %c0_i32_0 = arith.constant 0 : i32
    %c0_i32_1 = arith.constant 0 : i32
    return %c0_i32, %c0_i32_0 : i32, i32
  }
  func.func @transform_7(%arg0: i32) -> (i32, i32) {
    %c0_i32 = arith.constant 0 : i32
    %c0_i32_0 = arith.constant 0 : i32
    %c0_i32_1 = arith.constant 0 : i32
    return %c0_i32, %c0_i32_0 : i32, i32
  }
  func.func @transform_8(%arg0: i32) -> (i32, i32) {
    %c0_i32 = arith.constant 0 : i32
    %c0_i32_0 = arith.constant 0 : i32
    %c0_i32_1 = arith.constant 0 : i32
    return %c0_i32, %c0_i32_0 : i32, i32
  }
  func.func @transform_9(%arg0: i32) -> (i32, i32) {
    %c0_i32 = arith.constant 0 : i32
    %c0_i32_0 = arith.constant 0 : i32
    %c0_i32_1 = arith.constant 0 : i32
    return %c0_i32, %c0_i32_0 : i32, i32
  }
  func.func @transform_10(%arg0: i32) -> (i32, i32) {
    %c0_i32 = arith.constant 0 : i32
    %c0_i32_0 = arith.constant 0 : i32
    %c0_i32_1 = arith.constant 0 : i32
    return %c0_i32, %c0_i32_0 : i32, i32
  }
  func.func @transform_11(%arg0: i32) -> (i32, i32) {
    %c0_i32 = arith.constant 0 : i32
    %c0_i32_0 = arith.constant 0 : i32
    %c0_i32_1 = arith.constant 0 : i32
    return %c0_i32, %c0_i32_0 : i32, i32
  }
  func.func @transform_12(%arg0: i32) -> (i32, i32) {
    %c0_i32 = arith.constant 0 : i32
    %c0_i32_0 = arith.constant 0 : i32
    return %arg0, %c0_i32 : i32, i32
  }
}

</mosaic_0001>

<llo_original>
// kernel: tpu_custom_call.1
$region0: #{tpu_custom_call.1}
  #allocation0 [shape = 'u32[]', space=smem, size = 0x4, offset = 0x4, fixed_abs, tag = 'smem constant byte address 0x4 - core index']
  #allocation1 [shape = 'u32[144,128]{1,0:T(1,128)}', space=vmem, size = 0x12000, scoped, tag = 'internal scratch']
  %s0 = inlined_call_operand.vmem [shape: f32[32,33], index: 0, kind: input, shape index: {}]
  %s1 = inlined_call_operand.vmem [shape: f32[1,16], index: 1, kind: input, shape index: {}]
  %s2 = inlined_call_operand.vmem [shape: f32[1,16], index: 2, kind: input, shape index: {}]
  %s3 = inlined_call_operand.hbm [shape: f32[16,16], index: 3, kind: input, shape index: {}]
  %s4 = inlined_call_operand.vmem [shape: f32[1,16], index: 4, kind: input, shape index: {}]
  %s5 = inlined_call_operand.hbm [shape: f32[32,128], index: 5, kind: input, shape index: {}]
  %s6 = inlined_call_operand.hbm [shape: f32[16,128], index: 6, kind: input, shape index: {}]
  %s7 = inlined_call_operand.vmem [shape: f32[1,128], index: 7, kind: input, shape index: {}]
  %s8 = inlined_call_operand.vmem [shape: f32[128,128], index: 8, kind: input, shape index: {}]
  %s9 = inlined_call_operand.vmem [shape: f32[1,128], index: 9, kind: input, shape index: {}]
  %s10 = inlined_call_operand.vmem [shape: f32[128,32], index: 10, kind: input, shape index: {}]
  %s11 = inlined_call_operand.vmem [shape: f32[1,32], index: 11, kind: input, shape index: {}]
  %s12 = inlined_call_operand.hbm [shape: f32[32,32], index: 12, kind: output, shape index: {}]
  %s13 = sld [smem:[#allocation0]]
  $region70: #{tpu_custom_call.1} parent=0
    _
  %s15 = ssub.s32 1, %s13
  %s16 = scalar_select 0, %s15, %s13
  $region1: #{tpu_custom_call.1} parent=0
    #allocation2 [shape = 'u8[8192]{0}', space=vmem, size = 0x2000, scoped, tag = 'input window, operand 3, single buffered']
    #allocation3 [shape = 's32[1]{0}', space=sflag, size = 0x4, scoped, tag = 'scoped memory for tpu_custom_call.1']
    #allocation4 [shape = 's32[1]{0}', space=sflag, size = 0x4, scoped, tag = 'scoped memory for tpu_custom_call.1']
    #allocation5 [shape = 'u8[16384]{0}', space=vmem, size = 0x4000, scoped, tag = 'input window, operand 5, single buffered']
    #allocation6 [shape = 's32[1]{0}', space=sflag, size = 0x4, scoped, tag = 'scoped memory for tpu_custom_call.1']
    #allocation7 [shape = 'u8[8192]{0}', space=vmem, size = 0x2000, scoped, tag = 'input window, operand 6, single buffered']
    #allocation8 [shape = 'u8[16384]{0}', space=vmem, size = 0x4000, scoped, tag = 'output window, operand 0, single buffered']
    %17 = vsyncpa [#allocation3], 0
    %18 = vsyncpa [#allocation6], 0
    %19 = vsyncpa [#allocation4], 0
    // Predicated region
    $region2: #{tpu_custom_call.1} parent=1 // pred_check
      _
    $region3: #{tpu_custom_call.1} parent=1 // pred_check_branch
      %21 = sbr.rel (0) target = $region5
    $region4: #{tpu_custom_call.1} parent=1 // pred_region
      _
    $region5: #{tpu_custom_call.1} parent=1 // pred_fallthru
      _
    // Predicated region
    $region6: #{tpu_custom_call.1} parent=1 // pred_check
      _
    $region7: #{tpu_custom_call.1} parent=1 // pred_check_branch
      %23 = sbr.rel (0) target = $region9
    $region8: #{tpu_custom_call.1} parent=1 // pred_region
      _
    $region9: #{tpu_custom_call.1} parent=1 // pred_fallthru
      _
    // Predicated region
    $region10: #{tpu_custom_call.1} parent=1 // pred_check
      _
    $region11: #{tpu_custom_call.1} parent=1 // pred_check_branch
      %25 = sbr.rel (0) target = $region13
    $region12: #{tpu_custom_call.1} parent=1 // pred_region
      _
    $region13: #{tpu_custom_call.1} parent=1 // pred_fallthru
      _
    // Predicated region
    $region14: #{tpu_custom_call.1} parent=1 // pred_check
      _
    $region15: #{tpu_custom_call.1} parent=1 // pred_check_branch
      %27 = sbr.rel (0) target = $region17
    $region16: #{tpu_custom_call.1} parent=1 // pred_region
      %s29 = ssub.s32 256, 256
      %30 = vsyncadd [#allocation3], %s29
      %s31 = sshll.u32 [#allocation2], 4
      %s32 = int_to_ptr.vmem [resolvable:$true] %s31
      %37 = dma.hbm_to_vmem [thread:$0]  %s3, 256, %s32, [#allocation3], 128, 128, 8
    $region17: #{tpu_custom_call.1} parent=1 // pred_fallthru
      _
    // Predicated region
    $region18: #{tpu_custom_call.1} parent=1 // pred_check
      _
    $region19: #{tpu_custom_call.1} parent=1 // pred_check_branch
      %39 = sbr.rel (0) target = $region21
    $region20: #{tpu_custom_call.1} parent=1 // pred_region
      _
    $region21: #{tpu_custom_call.1} parent=1 // pred_fallthru
      _
    // Predicated region
    $region22: #{tpu_custom_call.1} parent=1 // pred_check
      _
    $region23: #{tpu_custom_call.1} parent=1 // pred_check_branch
      %41 = sbr.rel (0) target = $region25
    $region24: #{tpu_custom_call.1} parent=1 // pred_region
      %s43 = ssub.s32 512, 512
      %44 = vsyncadd [#allocation6], %s43
      %s45 = sshll.u32 [#allocation5], 4
      %s46 = int_to_ptr.vmem [resolvable:$true] %s45
      %51 = dma.hbm_to_vmem [thread:$0]  %s5, 512, %s46, [#allocation6], 128, 128, 8
    $region25: #{tpu_custom_call.1} parent=1 // pred_fallthru
      _
    // Predicated region
    $region26: #{tpu_custom_call.1} parent=1 // pred_check
      _
    $region27: #{tpu_custom_call.1} parent=1 // pred_check_branch
      %53 = sbr.rel (0) target = $region29
    $region28: #{tpu_custom_call.1} parent=1 // pred_region
      %s55 = ssub.s32 256, 256
      %56 = vsyncadd [#allocation6], %s55
      %s57 = sshll.u32 [#allocation7], 4
      %s58 = int_to_ptr.vmem [resolvable:$true] %s57
      %63 = dma.hbm_to_vmem [thread:$0]  %s6, 256, %s58, [#allocation6], 128, 128, 8
    $region29: #{tpu_custom_call.1} parent=1 // pred_fallthru
      _
    // Predicated region
    $region30: #{tpu_custom_call.1} parent=1 // pred_check
      _
    $region31: #{tpu_custom_call.1} parent=1 // pred_check_branch
      %65 = sbr.rel (0) target = $region33
    $region32: #{tpu_custom_call.1} parent=1 // pred_region
      _
    $region33: #{tpu_custom_call.1} parent=1 // pred_fallthru
      _
    // Predicated region
    $region34: #{tpu_custom_call.1} parent=1 // pred_check
      _
    $region35: #{tpu_custom_call.1} parent=1 // pred_check_branch
      %67 = sbr.rel (0) target = $region37
    $region36: #{tpu_custom_call.1} parent=1 // pred_region
      _
    $region37: #{tpu_custom_call.1} parent=1 // pred_fallthru
      _
    // Predicated region
    $region38: #{tpu_custom_call.1} parent=1 // pred_check
      _
    $region39: #{tpu_custom_call.1} parent=1 // pred_check_branch
      %69 = sbr.rel (0) target = $region41
    $region40: #{tpu_custom_call.1} parent=1 // pred_region
      _
    $region41: #{tpu_custom_call.1} parent=1 // pred_fallthru
      _
    // Predicated region
    $region42: #{tpu_custom_call.1} parent=1 // pred_check
      _
    $region43: #{tpu_custom_call.1} parent=1 // pred_check_branch
      %71 = sbr.rel (0) target = $region45
    $region44: #{tpu_custom_call.1} parent=1 // pred_region
      _
    $region45: #{tpu_custom_call.1} parent=1 // pred_fallthru
      _
    // Predicated region
    $region46: #{tpu_custom_call.1} parent=1 // pred_check
      _
    $region47: #{tpu_custom_call.1} parent=1 // pred_check_branch
      %73 = sbr.rel (0) target = $region49
    $region48: #{tpu_custom_call.1} parent=1 // pred_region
      _
    $region49: #{tpu_custom_call.1} parent=1 // pred_fallthru
      _
    // Predicated region
    $region50: #{tpu_custom_call.1} parent=1 // pred_check
      _
    $region51: #{tpu_custom_call.1} parent=1 // pred_check_branch
      %75 = sbr.rel (0) target = $region53
    $region52: #{tpu_custom_call.1} parent=1 // pred_region
      %76 = dma.done [#allocation3], 256
    $region53: #{tpu_custom_call.1} parent=1 // pred_fallthru
      _
    // Predicated region
    $region54: #{tpu_custom_call.1} parent=1 // pred_check
      _
    $region55: #{tpu_custom_call.1} parent=1 // pred_check_branch
      %78 = sbr.rel (0) target = $region57
    $region56: #{tpu_custom_call.1} parent=1 // pred_region
      %79 = dma.done [#allocation6], 512
    $region57: #{tpu_custom_call.1} parent=1 // pred_fallthru
      _
    // Predicated region
    $region58: #{tpu_custom_call.1} parent=1 // pred_check
      _
    $region59: #{tpu_custom_call.1} parent=1 // pred_check_branch
      %81 = sbr.rel (0) target = $region61
    $region60: #{tpu_custom_call.1} parent=1 // pred_region
      %82 = dma.done [#allocation6], 256
    $region61: #{tpu_custom_call.1} parent=1 // pred_fallthru
      _
    %v83 = vld [vmem:[%s0] sm:$0xff]
    %v84 = vld [vmem:[%s0 + $0x8] sm:$0xff]
    %v85 = vld [vmem:[%s0 + $0x10] sm:$0xff]
    %v86 = vld [vmem:[%s0 + $0x18] sm:$0xff]
    %v87 = vld [vmem:[#allocation5] sm:$0xff]
    %v88 = vld [vmem:[#allocation5 + $0x8] sm:$0xff]
    %v89 = vld [vmem:[#allocation5 + $0x10] sm:$0xff]
    %v90 = vld [vmem:[#allocation5 + $0x18] sm:$0xff]
    %v91 = vld [vmem:[%s1] sm:$0x1]
    %93 = vset.pattern.permute.xlu0 32
    %94 = vperm.xlu0 %93, %v83
    %v95 = vpop.permute.xlu0 %94
    %98 = vset.pattern.permute.xlu0 32
    %99 = vperm.xlu0 %98, %v84
    %v100 = vpop.permute.xlu0 %99
    %103 = vset.pattern.permute.xlu0 32
    %104 = vperm.xlu0 %103, %v85
    %v105 = vpop.permute.xlu0 %104
    %108 = vset.pattern.permute.xlu0 32
    %109 = vperm.xlu0 %108, %v86
    %v110 = vpop.permute.xlu0 %109
    %v113 = vlaneseq
    %v114 = vshrl.u32 %v113, 7
    %v115 = vsub.s32 0, %v114
    %v116 = vrot.slane %v91, %v115
    %v118 = vmul.f32 %v95, %v116
    %v119 = vmul.f32 %v100, %v116
    %v120 = vmul.f32 %v105, %v116
    %v121 = vmul.f32 %v110, %v116
    %v122 = vld [vmem:[%s2] sm:$0x1]
    %v124 = vlaneseq
    %v125 = vshrl.u32 %v124, 7
    %v126 = vsub.s32 0, %v125
    %v127 = vrot.slane %v122, %v126
    %v129 = vadd.f32 %v118, %v127
    %v130 = vadd.f32 %v119, %v127
    %v131 = vadd.f32 %v120, %v127
    %v132 = vadd.f32 %v121, %v127
    %v133 = vmul.f32 %v129, 0.5
    %v134 = vmul.f32 %v130, 0.5
    %v135 = vmul.f32 %v131, 0.5
    %v136 = vmul.f32 %v132, 0.5
    %v137 = vmul.f32 %v129, 0.70710677
    %v138 = vmul.f32 %v130, 0.70710677
    %v139 = vmul.f32 %v131, 0.70710677
    %v140 = vmul.f32 %v132, 0.70710677
    %v141 = verf.f32.pop %v137
    %v142 = verf.f32.pop %v138
    %v143 = verf.f32.pop %v139
    %v144 = verf.f32.pop %v140
    %v145 = vadd.f32 %v141, 1.0
    %v146 = vadd.f32 %v142, 1.0
    %v147 = vadd.f32 %v143, 1.0
    %v148 = vadd.f32 %v144, 1.0
    %v149 = vmul.f32 %v133, %v145
    %v150 = vmul.f32 %v134, %v146
    %v151 = vmul.f32 %v135, %v147
    %v152 = vmul.f32 %v136, %v148
    %v153 = vld [vmem:[#allocation2] sm:$0xff]
    %v154 = vld [vmem:[#allocation2 + $0x8] sm:$0xff]
    %v155 = vld [vmem:[%s4] sm:$0x1]
    %v157 = vlaneseq
    %v158 = vshrl.u32 %v157, 7
    %v159 = vsub.s32 0, %v158
    %v160 = vrot.slane %v155, %v159
    %vm162 = vcmask 130048
    %v164 = vsel %vm162, %v149, 0
    %v167 = vsel %vm162, %v150, 0
    %v170 = vsel %vm162, %v151, 0
    %v173 = vsel %vm162, %v152, 0
    %175 = vmatprep.subr.mxu0 0.0
    %176 = vmatpush1.msra.mxu0 %v153
    %177 = vmatprep.subr.mxu0 0.0
    %178 = vmatpush1.msra.mxu0 %v154
    %179 = vmatprep.subr.mxu0 0.0
    %180 = vmatpush1.msra.mxu0 0.0
    %181 = vmatprep.subr.mxu0 0.0
    %182 = vmatpush1.msra.mxu0 0.0
    %183 = vmatprep.subr.mxu0 0.0
    %184 = vmatpush1.msra.mxu0 0.0
    %185 = vmatprep.subr.mxu0 0.0
    %186 = vmatpush1.msra.mxu0 0.0
    %187 = vmatprep.subr.mxu0 0.0
    %188 = vmatpush1.msra.mxu0 0.0
    %189 = vmatprep.subr.mxu0 0.0
    %190 = vmatpush1.msra.mxu0 0.0
    %191 = vmatprep.subr.mxu0 0.0
    %192 = vmatpush1.msra.mxu0 0.0
    %193 = vmatprep.subr.mxu0 0.0
    %194 = vmatpush1.msra.mxu0 0.0
    %195 = vmatprep.subr.mxu0 0.0
    %196 = vmatpush1.msra.mxu0 0.0
    %197 = vmatprep.subr.mxu0 0.0
    %198 = vmatpush1.msra.mxu0 0.0
    %199 = vmatprep.subr.mxu0 0.0
    %200 = vmatpush1.msra.mxu0 0.0
    %201 = vmatprep.subr.mxu0 0.0
    %202 = vmatpush1.msra.mxu0 0.0
    %203 = vmatprep.subr.mxu0 0.0
    %204 = vmatpush1.msra.mxu0 0.0
    %205 = vmatprep.subr.mxu0 0.0
    %206 = vmatpush1.msra.mxu0 0.0
    %207 = vmatprep.subr.mxu0 0.0
    %208 = vmatpush1.msra.mxu0 0.0
    %209 = vmatprep.subr.mxu0 0.0
    %210 = vmatpush1.msra.mxu0 0.0
    %211 = vmatprep.subr.mxu0 0.0
    %212 = vmatpush1.msra.mxu0 0.0
    %213 = vmatprep.subr.mxu0 0.0
    %214 = vmatpush1.msra.mxu0 0.0
    %215 = vmatprep.subr.mxu0 0.0
    %216 = vmatpush1.msra.mxu0 0.0
    %217 = vmatprep.subr.mxu0 0.0
    %218 = vmatpush1.msra.mxu0 0.0
    %219 = vmatprep.subr.mxu0 0.0
    %220 = vmatpush1.msra.mxu0 0.0
    %221 = vmatprep.subr.mxu0 0.0
    %222 = vmatpush1.msra.mxu0 0.0
    %223 = vmatprep.subr.mxu0 0.0
    %224 = vmatpush1.msra.mxu0 0.0
    %225 = vmatprep.subr.mxu0 0.0
    %226 = vmatpush1.msra.mxu0 0.0
    %227 = vmatprep.subr.mxu0 0.0
    %228 = vmatpush1.msra.mxu0 0.0
    %229 = vmatprep.subr.mxu0 0.0
    %230 = vmatpush1.msra.mxu0 0.0
    %231 = vmatprep.subr.mxu0 0.0
    %232 = vmatpush1.msra.mxu0 0.0
    %233 = vmatprep.subr.mxu0 0.0
    %234 = vmatpush1.msra.mxu0 0.0
    %235 = vmatprep.subr.mxu0 0.0
    %236 = vmatpush1.msra.mxu0 0.0
    %237 = vmatprep.subr.mxu0 0.0
    %238 = vmatpush1.msra.mxu0 0.0
    %239 = vmatprep.mubr.f32.mxu0 0.0
    %240 = vmatmul.mubr.f32.gmra.mrb[0].mxu0 %v164
    %v241 = vpop.f32.mrb[0].mxu0
    %v242 = vadd.f32 %v160, %v241
    %v243 = vpop.f32.mrb[0].mxu0
    %244 = vmatprep.mubr.f32.mxu0 0.0
    %245 = vmatmul.mubr.f32.gmra.mrb[0].mxu0 %v167
    %v246 = vpop.f32.mrb[0].mxu0
    %v247 = vadd.f32 %v160, %v246
    %v248 = vpop.f32.mrb[0].mxu0
    %249 = vmatprep.mubr.f32.mxu0 0.0
    %250 = vmatmul.mubr.f32.gmra.mrb[0].mxu0 %v170
    %v251 = vpop.f32.mrb[0].mxu0
    %v252 = vadd.f32 %v160, %v251
    %v253 = vpop.f32.mrb[0].mxu0
    %254 = vmatprep.mubr.f32.mxu0 0.0
    %255 = vmatmul.mubr.f32.gmra.mrb[0].mxu0 %v173
    %v256 = vpop.f32.mrb[0].mxu0
    %v257 = vadd.f32 %v160, %v256
    %v258 = vpop.f32.mrb[0].mxu0
    %259 = vdwg.mxu0
    %v260 = vmul.f32 %v242, 0.5
    %v261 = vmul.f32 %v247, 0.5
    %v262 = vmul.f32 %v252, 0.5
    %v263 = vmul.f32 %v257, 0.5
    %v264 = vmul.f32 %v242, 0.70710677
    %v265 = vmul.f32 %v247, 0.70710677
    %v266 = vmul.f32 %v252, 0.70710677
    %v267 = vmul.f32 %v257, 0.70710677
    %v268 = verf.f32.pop %v264
    %v269 = verf.f32.pop %v265
    %v270 = verf.f32.pop %v266
    %v271 = verf.f32.pop %v267
    %v272 = vadd.f32 %v268, 1.0
    %v273 = vadd.f32 %v269, 1.0
    %v274 = vadd.f32 %v270, 1.0
    %v275 = vadd.f32 %v271, 1.0
    %v276 = vmul.f32 %v260, %v272
    %v277 = vmul.f32 %v261, %v273
    %v278 = vmul.f32 %v262, %v274
    %v279 = vmul.f32 %v263, %v275
    %v280 = vld [vmem:[#allocation7] sm:$0xff]
    %v281 = vld [vmem:[#allocation7 + $0x8] sm:$0xff]
    %v283 = vsel %vm162, %v276, 0
    %v286 = vsel %vm162, %v277, 0
    %v289 = vsel %vm162, %v278, 0
    %v292 = vsel %vm162, %v279, 0
    %294 = vmatprep.subr.mxu0 0.0
    %295 = vmatpush1.msra.mxu0 %v280
    %296 = vmatprep.subr.mxu0 0.0
    %297 = vmatpush1.msra.mxu0 %v281
    %298 = vmatprep.subr.mxu0 0.0
    %299 = vmatpush1.msra.mxu0 0.0
    %300 = vmatprep.subr.mxu0 0.0
    %301 = vmatpush1.msra.mxu0 0.0
    %302 = vmatprep.subr.mxu0 0.0
    %303 = vmatpush1.msra.mxu0 0.0
    %304 = vmatprep.subr.mxu0 0.0
    %305 = vmatpush1.msra.mxu0 0.0
    %306 = vmatprep.subr.mxu0 0.0
    %307 = vmatpush1.msra.mxu0 0.0
    %308 = vmatprep.subr.mxu0 0.0
    %309 = vmatpush1.msra.mxu0 0.0
    %310 = vmatprep.subr.mxu0 0.0
    %311 = vmatpush1.msra.mxu0 0.0
    %312 = vmatprep.subr.mxu0 0.0
    %313 = vmatpush1.msra.mxu0 0.0
    %314 = vmatprep.subr.mxu0 0.0
    %315 = vmatpush1.msra.mxu0 0.0
    %316 = vmatprep.subr.mxu0 0.0
    %317 = vmatpush1.msra.mxu0 0.0
    %318 = vmatprep.subr.mxu0 0.0
    %319 = vmatpush1.msra.mxu0 0.0
    %320 = vmatprep.subr.mxu0 0.0
    %321 = vmatpush1.msra.mxu0 0.0
    %322 = vmatprep.subr.mxu0 0.0
    %323 = vmatpush1.msra.mxu0 0.0
    %324 = vmatprep.subr.mxu0 0.0
    %325 = vmatpush1.msra.mxu0 0.0
    %326 = vmatprep.subr.mxu0 0.0
    %327 = vmatpush1.msra.mxu0 0.0
    %328 = vmatprep.subr.mxu0 0.0
    %329 = vmatpush1.msra.mxu0 0.0
    %330 = vmatprep.subr.mxu0 0.0
    %331 = vmatpush1.msra.mxu0 0.0
    %332 = vmatprep.subr.mxu0 0.0
    %333 = vmatpush1.msra.mxu0 0.0
    %334 = vmatprep.subr.mxu0 0.0
    %335 = vmatpush1.msra.mxu0 0.0
    %336 = vmatprep.subr.mxu0 0.0
    %337 = vmatpush1.msra.mxu0 0.0
    %338 = vmatprep.subr.mxu0 0.0
    %339 = vmatpush1.msra.mxu0 0.0
    %340 = vmatprep.subr.mxu0 0.0
    %341 = vmatpush1.msra.mxu0 0.0
    %342 = vmatprep.subr.mxu0 0.0
    %343 = vmatpush1.msra.mxu0 0.0
    %344 = vmatprep.subr.mxu0 0.0
    %345 = vmatpush1.msra.mxu0 0.0
    %346 = vmatprep.subr.mxu0 0.0
    %347 = vmatpush1.msra.mxu0 0.0
    %348 = vmatprep.subr.mxu0 0.0
    %349 = vmatpush1.msra.mxu0 0.0
    %350 = vmatprep.subr.mxu0 0.0
    %351 = vmatpush1.msra.mxu0 0.0
    %352 = vmatprep.subr.mxu0 0.0
    %353 = vmatpush1.msra.mxu0 0.0
    %354 = vmatprep.subr.mxu0 0.0
    %355 = vmatpush1.msra.mxu0 0.0
    %356 = vmatprep.subr.mxu0 0.0
    %357 = vmatpush1.msra.mxu0 0.0
    %358 = vmatprep.mubr.f32.mxu0 0.0
    %359 = vmatmul.mubr.f32.gmra.mrb[0].mxu0 %v283
    %v360 = vpop.f32.mrb[0].mxu0
    %v361 = vadd.f32 0.0, %v360
    %v362 = vpop.f32.mrb[0].mxu0
    %363 = vmatprep.mubr.f32.mxu0 0.0
    %364 = vmatmul.mubr.f32.gmra.mrb[0].mxu0 %v286
    %v365 = vpop.f32.mrb[0].mxu0
    %v366 = vadd.f32 0.0, %v365
    %v367 = vpop.f32.mrb[0].mxu0
    %368 = vmatprep.mubr.f32.mxu0 0.0
    %369 = vmatmul.mubr.f32.gmra.mrb[0].mxu0 %v289
    %v370 = vpop.f32.mrb[0].mxu0
    %v371 = vadd.f32 0.0, %v370
    %v372 = vpop.f32.mrb[0].mxu0
    %373 = vmatprep.mubr.f32.mxu0 0.0
    %374 = vmatmul.mubr.f32.gmra.mrb[0].mxu0 %v292
    %v375 = vpop.f32.mrb[0].mxu0
    %v376 = vadd.f32 0.0, %v375
    %v377 = vpop.f32.mrb[0].mxu0
    %378 = vdwg.mxu0
    %vm379 = vcmask 261120
    %v380 = vsel %vm379, %v83, 0
    %v382 = vsel %vm379, %v84, 0
    %v384 = vsel %vm379, %v85, 0
    %v386 = vsel %vm379, %v86, 0
    %388 = vmatprep.subr.mxu0 0.0
    %389 = vmatpush1.msra.mxu0 %v87
    %390 = vmatprep.subr.mxu0 0.0
    %391 = vmatpush1.msra.mxu0 %v88
    %392 = vmatprep.subr.mxu0 0.0
    %393 = vmatpush1.msra.mxu0 %v89
    %394 = vmatprep.subr.mxu0 0.0
    %395 = vmatpush1.msra.mxu0 %v90
    %396 = vmatprep.subr.mxu0 0.0
    %397 = vmatpush1.msra.mxu0 0.0
    %398 = vmatprep.subr.mxu0 0.0
    %399 = vmatpush1.msra.mxu0 0.0
    %400 = vmatprep.subr.mxu0 0.0
    %401 = vmatpush1.msra.mxu0 0.0
    %402 = vmatprep.subr.mxu0 0.0
    %403 = vmatpush1.msra.mxu0 0.0
    %404 = vmatprep.subr.mxu0 0.0
    %405 = vmatpush1.msra.mxu0 0.0
    %406 = vmatprep.subr.mxu0 0.0
    %407 = vmatpush1.msra.mxu0 0.0
    %408 = vmatprep.subr.mxu0 0.0
    %409 = vmatpush1.msra.mxu0 0.0
    %410 = vmatprep.subr.mxu0 0.0
    %411 = vmatpush1.msra.mxu0 0.0
    %412 = vmatprep.subr.mxu0 0.0
    %413 = vmatpush1.msra.mxu0 0.0
    %414 = vmatprep.subr.mxu0 0.0
    %415 = vmatpush1.msra.mxu0 0.0
    %416 = vmatprep.subr.mxu0 0.0
    %417 = vmatpush1.msra.mxu0 0.0
    %418 = vmatprep.subr.mxu0 0.0
    %419 = vmatpush1.msra.mxu0 0.0
    %420 = vmatprep.subr.mxu0 0.0
    %421 = vmatpush1.msra.mxu0 0.0
    %422 = vmatprep.subr.mxu0 0.0
    %423 = vmatpush1.msra.mxu0 0.0
    %424 = vmatprep.subr.mxu0 0.0
    %425 = vmatpush1.msra.mxu0 0.0
    %426 = vmatprep.subr.mxu0 0.0
    %427 = vmatpush1.msra.mxu0 0.0
    %428 = vmatprep.subr.mxu0 0.0
    %429 = vmatpush1.msra.mxu0 0.0
    %430 = vmatprep.subr.mxu0 0.0
    %431 = vmatpush1.msra.mxu0 0.0
    %432 = vmatprep.subr.mxu0 0.0
    %433 = vmatpush1.msra.mxu0 0.0
    %434 = vmatprep.subr.mxu0 0.0
    %435 = vmatpush1.msra.mxu0 0.0
    %436 = vmatprep.subr.mxu0 0.0
    %437 = vmatpush1.msra.mxu0 0.0
    %438 = vmatprep.subr.mxu0 0.0
    %439 = vmatpush1.msra.mxu0 0.0
    %440 = vmatprep.subr.mxu0 0.0
    %441 = vmatpush1.msra.mxu0 0.0
    %442 = vmatprep.subr.mxu0 0.0
    %443 = vmatpush1.msra.mxu0 0.0
    %444 = vmatprep.subr.mxu0 0.0
    %445 = vmatpush1.msra.mxu0 0.0
    %446 = vmatprep.subr.mxu0 0.0
    %447 = vmatpush1.msra.mxu0 0.0
    %448 = vmatprep.subr.mxu0 0.0
    %449 = vmatpush1.msra.mxu0 0.0
    %450 = vmatprep.subr.mxu0 0.0
    %451 = vmatpush1.msra.mxu0 0.0
    %452 = vmatprep.mubr.f32.mxu0 0.0
    %453 = vmatmul.mubr.f32.gmra.mrb[0].mxu0 %v380
    %v454 = vpop.f32.mrb[0].mxu0
    %v455 = vadd.f32 %v361, %v454
    %v456 = vpop.f32.mrb[0].mxu0
    %457 = vmatprep.mubr.f32.mxu0 0.0
    %458 = vmatmul.mubr.f32.gmra.mrb[0].mxu0 %v382
    %v459 = vpop.f32.mrb[0].mxu0
    %v460 = vadd.f32 %v366, %v459
    %v461 = vpop.f32.mrb[0].mxu0
    %462 = vmatprep.mubr.f32.mxu0 0.0
    %463 = vmatmul.mubr.f32.gmra.mrb[0].mxu0 %v384
    %v464 = vpop.f32.mrb[0].mxu0
    %v465 = vadd.f32 %v371, %v464
    %v466 = vpop.f32.mrb[0].mxu0
    %467 = vmatprep.mubr.f32.mxu0 0.0
    %468 = vmatmul.mubr.f32.gmra.mrb[0].mxu0 %v386
    %v469 = vpop.f32.mrb[0].mxu0
    %v470 = vadd.f32 %v376, %v469
    %v471 = vpop.f32.mrb[0].mxu0
    %472 = vdwg.mxu0
    %v473 = vld [vmem:[%s7] sm:$0x1]
    %v475 = vlaneseq
    %v476 = vshrl.u32 %v475, 7
    %v477 = vsub.s32 0, %v476
    %v478 = vrot.slane %v473, %v477
    %v480 = vadd.f32 %v455, %v478
    %v481 = vadd.f32 %v460, %v478
    %v482 = vadd.f32 %v465, %v478
    %v483 = vadd.f32 %v470, %v478
    %v484 = vmul.f32 %v480, 0.5
    %v485 = vmul.f32 %v481, 0.5
    %v486 = vmul.f32 %v482, 0.5
    %v487 = vmul.f32 %v483, 0.5
    %v488 = vmul.f32 %v480, 0.70710677
    %v489 = vmul.f32 %v481, 0.70710677
    %v490 = vmul.f32 %v482, 0.70710677
    %v491 = vmul.f32 %v483, 0.70710677
    %v492 = verf.f32.pop %v488
    %v493 = verf.f32.pop %v489
    %v494 = verf.f32.pop %v490
    %v495 = verf.f32.pop %v491
    %v496 = vadd.f32 %v492, 1.0
    %v497 = vadd.f32 %v493, 1.0
    %v498 = vadd.f32 %v494, 1.0
    %v499 = vadd.f32 %v495, 1.0
    %v500 = vmul.f32 %v484, %v496
    %v501 = vmul.f32 %v485, %v497
    %v502 = vmul.f32 %v486, %v498
    %v503 = vmul.f32 %v487, %v499
    %v504 = vld [vmem:[%s8] sm:$0xff]
    %v505 = vld [vmem:[%s8 + $0x8] sm:$0xff]
    %v506 = vld [vmem:[%s8 + $0x10] sm:$0xff]
    %v507 = vld [vmem:[%s8 + $0x18] sm:$0xff]
    %v508 = vld [vmem:[%s8 + $0x20] sm:$0xff]
    %v509 = vld [vmem:[%s8 + $0x28] sm:$0xff]
    %v510 = vld [vmem:[%s8 + $0x30] sm:$0xff]
    %v511 = vld [vmem:[%s8 + $0x38] sm:$0xff]
    %v512 = vld [vmem:[%s8 + $0x40] sm:$0xff]
    %v513 = vld [vmem:[%s8 + $0x48] sm:$0xff]
    %v514 = vld [vmem:[%s8 + $0x50] sm:$0xff]
    %v515 = vld [vmem:[%s8 + $0x58] sm:$0xff]
    %v516 = vld [vmem:[%s8 + $0x60] sm:$0xff]
    %v517 = vld [vmem:[%s8 + $0x68] sm:$0xff]
    %v518 = vld [vmem:[%s8 + $0x70] sm:$0xff]
    %v519 = vld [vmem:[%s8 + $0x78] sm:$0xff]
    %v520 = vld [vmem:[%s9] sm:$0x1]
    %v522 = vlaneseq
    %v523 = vshrl.u32 %v522, 7
    %v524 = vsub.s32 0, %v523
    %v525 = vrot.slane %v520, %v524
    %527 = vmatprep.subr.mxu0 0.0
    %528 = vmatpush1.msra.mxu0 %v504
    %529 = vmatprep.subr.mxu0 0.0
    %530 = vmatpush1.msra.mxu0 %v505
    %531 = vmatprep.subr.mxu0 0.0
    %532 = vmatpush1.msra.mxu0 %v506
    %533 = vmatprep.subr.mxu0 0.0
    %534 = vmatpush1.msra.mxu0 %v507
    %535 = vmatprep.subr.mxu0 0.0
    %536 = vmatpush1.msra.mxu0 %v508
    %537 = vmatprep.subr.mxu0 0.0
    %538 = vmatpush1.msra.mxu0 %v509
    %539 = vmatprep.subr.mxu0 0.0
    %540 = vmatpush1.msra.mxu0 %v510
    %541 = vmatprep.subr.mxu0 0.0
    %542 = vmatpush1.msra.mxu0 %v511
    %543 = vmatprep.subr.mxu0 0.0
    %544 = vmatpush1.msra.mxu0 %v512
    %545 = vmatprep.subr.mxu0 0.0
    %546 = vmatpush1.msra.mxu0 %v513
    %547 = vmatprep.subr.mxu0 0.0
    %548 = vmatpush1.msra.mxu0 %v514
    %549 = vmatprep.subr.mxu0 0.0
    %550 = vmatpush1.msra.mxu0 %v515
    %551 = vmatprep.subr.mxu0 0.0
    %552 = vmatpush1.msra.mxu0 %v516
    %553 = vmatprep.subr.mxu0 0.0
    %554 = vmatpush1.msra.mxu0 %v517
    %555 = vmatprep.subr.mxu0 0.0
    %556 = vmatpush1.msra.mxu0 %v518
    %557 = vmatprep.subr.mxu0 0.0
    %558 = vmatpush1.msra.mxu0 %v519
    %559 = vmatprep.subr.mxu0 0.0
    %560 = vmatpush1.msra.mxu0 0.0
    %561 = vmatprep.subr.mxu0 0.0
    %562 = vmatpush1.msra.mxu0 0.0
    %563 = vmatprep.subr.mxu0 0.0
    %564 = vmatpush1.msra.mxu0 0.0
    %565 = vmatprep.subr.mxu0 0.0
    %566 = vmatpush1.msra.mxu0 0.0
    %567 = vmatprep.subr.mxu0 0.0
    %568 = vmatpush1.msra.mxu0 0.0
    %569 = vmatprep.subr.mxu0 0.0
    %570 = vmatpush1.msra.mxu0 0.0
    %571 = vmatprep.subr.mxu0 0.0
    %572 = vmatpush1.msra.mxu0 0.0
    %573 = vmatprep.subr.mxu0 0.0
    %574 = vmatpush1.msra.mxu0 0.0
    %575 = vmatprep.subr.mxu0 0.0
    %576 = vmatpush1.msra.mxu0 0.0
    %577 = vmatprep.subr.mxu0 0.0
    %578 = vmatpush1.msra.mxu0 0.0
    %579 = vmatprep.subr.mxu0 0.0
    %580 = vmatpush1.msra.mxu0 0.0
    %581 = vmatprep.subr.mxu0 0.0
    %582 = vmatpush1.msra.mxu0 0.0
    %583 = vmatprep.subr.mxu0 0.0
    %584 = vmatpush1.msra.mxu0 0.0
    %585 = vmatprep.subr.mxu0 0.0
    %586 = vmatpush1.msra.mxu0 0.0
    %587 = vmatprep.subr.mxu0 0.0
    %588 = vmatpush1.msra.mxu0 0.0
    %589 = vmatprep.subr.mxu0 0.0
    %590 = vmatpush1.msra.mxu0 0.0
    %591 = vmatprep.mubr.f32.mxu0 0.0
    %592 = vmatmul.mubr.f32.gmra.mrb[0].mxu0 %v500
    %v593 = vpop.f32.mrb[0].mxu0
    %v594 = vadd.f32 %v525, %v593
    %v595 = vpop.f32.mrb[0].mxu0
    %596 = vmatprep.mubr.f32.mxu0 0.0
    %597 = vmatmul.mubr.f32.gmra.mrb[0].mxu0 %v501
    %v598 = vpop.f32.mrb[0].mxu0
    %v599 = vadd.f32 %v525, %v598
    %v600 = vpop.f32.mrb[0].mxu0
    %601 = vmatprep.mubr.f32.mxu0 0.0
    %602 = vmatmul.mubr.f32.gmra.mrb[0].mxu0 %v502
    %v603 = vpop.f32.mrb[0].mxu0
    %v604 = vadd.f32 %v525, %v603
    %v605 = vpop.f32.mrb[0].mxu0
    %606 = vmatprep.mubr.f32.mxu0 0.0
    %607 = vmatmul.mubr.f32.gmra.mrb[0].mxu0 %v503
    %v608 = vpop.f32.mrb[0].mxu0
    %v609 = vadd.f32 %v525, %v608
    %v610 = vpop.f32.mrb[0].mxu0
    %611 = vdwg.mxu0
    %v612 = vmul.f32 %v594, 0.5
    %v613 = vmul.f32 %v599, 0.5
    %v614 = vmul.f32 %v604, 0.5
    %v615 = vmul.f32 %v609, 0.5
    %v616 = vmul.f32 %v594, 0.70710677
    %v617 = vmul.f32 %v599, 0.70710677
    %v618 = vmul.f32 %v604, 0.70710677
    %v619 = vmul.f32 %v609, 0.70710677
    %v620 = verf.f32.pop %v616
    %v621 = verf.f32.pop %v617
    %v622 = verf.f32.pop %v618
    %v623 = verf.f32.pop %v619
    %v624 = vadd.f32 %v620, 1.0
    %v625 = vadd.f32 %v621, 1.0
    %v626 = vadd.f32 %v622, 1.0
    %v627 = vadd.f32 %v623, 1.0
    %v628 = vmul.f32 %v612, %v624
    %v629 = vmul.f32 %v613, %v625
    %v630 = vmul.f32 %v614, %v626
    %v631 = vmul.f32 %v615, %v627
    %v632 = vld [vmem:[%s10] sm:$0xff]
    %v633 = vld [vmem:[%s10 + $0x8] sm:$0xff]
    %v634 = vld [vmem:[%s10 + $0x10] sm:$0xff]
    %v635 = vld [vmem:[%s10 + $0x18] sm:$0xff]
    %v636 = vld [vmem:[%s10 + $0x20] sm:$0xff]
    %v637 = vld [vmem:[%s10 + $0x28] sm:$0xff]
    %v638 = vld [vmem:[%s10 + $0x30] sm:$0xff]
    %v639 = vld [vmem:[%s10 + $0x38] sm:$0xff]
    %v640 = vld [vmem:[%s10 + $0x40] sm:$0xff]
    %v641 = vld [vmem:[%s10 + $0x48] sm:$0xff]
    %v642 = vld [vmem:[%s10 + $0x50] sm:$0xff]
    %v643 = vld [vmem:[%s10 + $0x58] sm:$0xff]
    %v644 = vld [vmem:[%s10 + $0x60] sm:$0xff]
    %v645 = vld [vmem:[%s10 + $0x68] sm:$0xff]
    %v646 = vld [vmem:[%s10 + $0x70] sm:$0xff]
    %v647 = vld [vmem:[%s10 + $0x78] sm:$0xff]
    %v648 = vld [vmem:[%s11] sm:$0x1]
    %v650 = vlaneseq
    %v651 = vshrl.u32 %v650, 7
    %v652 = vsub.s32 0, %v651
    %v653 = vrot.slane %v648, %v652
    %655 = vmatprep.subr.mxu0 0.0
    %656 = vmatpush1.msra.mxu0 %v632
    %657 = vmatprep.subr.mxu0 0.0
    %658 = vmatpush1.msra.mxu0 %v633
    %659 = vmatprep.subr.mxu0 0.0
    %660 = vmatpush1.msra.mxu0 %v634
    %661 = vmatprep.subr.mxu0 0.0
    %662 = vmatpush1.msra.mxu0 %v635
    %663 = vmatprep.subr.mxu0 0.0
    %664 = vmatpush1.msra.mxu0 %v636
    %665 = vmatprep.subr.mxu0 0.0
    %666 = vmatpush1.msra.mxu0 %v637
    %667 = vmatprep.subr.mxu0 0.0
    %668 = vmatpush1.msra.mxu0 %v638
    %669 = vmatprep.subr.mxu0 0.0
    %670 = vmatpush1.msra.mxu0 %v639
    %671 = vmatprep.subr.mxu0 0.0
    %672 = vmatpush1.msra.mxu0 %v640
    %673 = vmatprep.subr.mxu0 0.0
    %674 = vmatpush1.msra.mxu0 %v641
    %675 = vmatprep.subr.mxu0 0.0
    %676 = vmatpush1.msra.mxu0 %v642
    %677 = vmatprep.subr.mxu0 0.0
    %678 = vmatpush1.msra.mxu0 %v643
    %679 = vmatprep.subr.mxu0 0.0
    %680 = vmatpush1.msra.mxu0 %v644
    %681 = vmatprep.subr.mxu0 0.0
    %682 = vmatpush1.msra.mxu0 %v645
    %683 = vmatprep.subr.mxu0 0.0
    %684 = vmatpush1.msra.mxu0 %v646
    %685 = vmatprep.subr.mxu0 0.0
    %686 = vmatpush1.msra.mxu0 %v647
    %687 = vmatprep.subr.mxu0 0.0
    %688 = vmatpush1.msra.mxu0 0.0
    %689 = vmatprep.subr.mxu0 0.0
    %690 = vmatpush1.msra.mxu0 0.0
    %691 = vmatprep.subr.mxu0 0.0
    %692 = vmatpush1.msra.mxu0 0.0
    %693 = vmatprep.subr.mxu0 0.0
    %694 = vmatpush1.msra.mxu0 0.0
    %695 = vmatprep.subr.mxu0 0.0
    %696 = vmatpush1.msra.mxu0 0.0
    %697 = vmatprep.subr.mxu0 0.0
    %698 = vmatpush1.msra.mxu0 0.0
    %699 = vmatprep.subr.mxu0 0.0
    %700 = vmatpush1.msra.mxu0 0.0
    %701 = vmatprep.subr.mxu0 0.0
    %702 = vmatpush1.msra.mxu0 0.0
    %703 = vmatprep.subr.mxu0 0.0
    %704 = vmatpush1.msra.mxu0 0.0
    %705 = vmatprep.subr.mxu0 0.0
    %706 = vmatpush1.msra.mxu0 0.0
    %707 = vmatprep.subr.mxu0 0.0
    %708 = vmatpush1.msra.mxu0 0.0
    %709 = vmatprep.subr.mxu0 0.0
    %710 = vmatpush1.msra.mxu0 0.0
    %711 = vmatprep.subr.mxu0 0.0
    %712 = vmatpush1.msra.mxu0 0.0
    %713 = vmatprep.subr.mxu0 0.0
    %714 = vmatpush1.msra.mxu0 0.0
    %715 = vmatprep.subr.mxu0 0.0
    %716 = vmatpush1.msra.mxu0 0.0
    %717 = vmatprep.subr.mxu0 0.0
    %718 = vmatpush1.msra.mxu0 0.0
    %719 = vmatprep.mubr.f32.mxu0 0.0
    %720 = vmatmul.mubr.f32.gmra.mrb[0].mxu0 %v628
    %v721 = vpop.f32.mrb[0].mxu0
    %v722 = vadd.f32 %v653, %v721
    %v723 = vpop.f32.mrb[0].mxu0
    %724 = vmatprep.mubr.f32.mxu0 0.0
    %725 = vmatmul.mubr.f32.gmra.mrb[0].mxu0 %v629
    %v726 = vpop.f32.mrb[0].mxu0
    %v727 = vadd.f32 %v653, %v726
    %v728 = vpop.f32.mrb[0].mxu0
    %729 = vmatprep.mubr.f32.mxu0 0.0
    %730 = vmatmul.mubr.f32.gmra.mrb[0].mxu0 %v630
    %v731 = vpop.f32.mrb[0].mxu0
    %v732 = vadd.f32 %v653, %v731
    %v733 = vpop.f32.mrb[0].mxu0
    %734 = vmatprep.mubr.f32.mxu0 0.0
    %735 = vmatmul.mubr.f32.gmra.mrb[0].mxu0 %v631
    %v736 = vpop.f32.mrb[0].mxu0
    %v737 = vadd.f32 %v653, %v736
    %v738 = vpop.f32.mrb[0].mxu0
    %739 = vdwg.mxu0
    %740 = vst.msk [vmem:[#allocation8] sm:$0xff] %vm379, %v722
    %741 = vst.msk [vmem:[#allocation8 + $0x8] sm:$0xff] %vm379, %v727
    %742 = vst.msk [vmem:[#allocation8 + $0x10] sm:$0xff] %vm379, %v732
    %743 = vst.msk [vmem:[#allocation8 + $0x18] sm:$0xff] %vm379, %v737
    // Predicated region
    $region62: #{tpu_custom_call.1} parent=1 // pred_check
      _
    $region63: #{tpu_custom_call.1} parent=1 // pred_check_branch
      %745 = sbr.rel (0) target = $region65
    $region64: #{tpu_custom_call.1} parent=1 // pred_region
      %s747 = ssub.s32 512, 512
      %748 = vsyncadd [#allocation4], %s747
      %s749 = sshll.u32 [#allocation8], 4
      %s750 = int_to_ptr.vmem [resolvable:$true] %s749
      %755 = dma.vmem_to_hbm [thread:$0]  %s750, 512, %s12, [#allocation4], 128, 128, 8
    $region65: #{tpu_custom_call.1} parent=1 // pred_fallthru
      _
    // Predicated region
    $region66: #{tpu_custom_call.1} parent=1 // pred_check
      _
    $region67: #{tpu_custom_call.1} parent=1 // pred_check_branch
      %757 = sbr.rel (0) target = $region69
    $region68: #{tpu_custom_call.1} parent=1 // pred_region
      %758 = dma.done [#allocation4], 512
    $region69: #{tpu_custom_call.1} parent=1 // pred_fallthru
      _
    %759 = vsyncpa [#allocation3], 1
    %760 = vsyncpa [#allocation6], 1
    %761 = vsyncpa [#allocation4], 1

</llo_original>
